<compile_context>
chip_gen: v5e
topology: v5e:2x2
jax: 0.10.0
libtpu: 0.0.40
codegen_flags: <defaults>
</compile_context>

<pallas_src>
import functools

import jax
import jax.numpy as jnp
from jax.experimental import pallas as pl
from jax.experimental.pallas import tpu as pltpu

_LANE = 128        # TPU lane width
_TILE_ALIGN = 16   # bf16 packs 16 rows per vreg -> keep batch tiles 16-aligned


def _round_up(x: int, m: int) -> int:
    return ((x + m - 1) // m) * m


def _classifier_kernel(x_ref, w1_ref, b1_ref, w2_ref, b2_ref, w3_ref, b3_ref,
                       o_ref, *, classifier_output_idx: int, compute_dtype):
    """One batch tile of the MLP forward + selective sigmoid (weights VMEM-resident)."""
    # Cast x in-kernel (kernel reads f32 straight from HBM; no wrapper cast pass).
    x = x_ref[...].astype(compute_dtype)

    # Layer 1: Linear + ReLU  (bf16 operands, f32 MXU accumulation)
    h = jnp.dot(x, w1_ref[...], preferred_element_type=jnp.float32)
    h = jnp.maximum(h + b1_ref[...], 0.0)

    # Layer 2: Linear + ReLU
    h = jnp.dot(h.astype(compute_dtype), w2_ref[...],
                preferred_element_type=jnp.float32)
    h = jnp.maximum(h + b2_ref[...], 0.0)

    # Output layer: Linear (no activation)
    out = jnp.dot(h.astype(compute_dtype), w3_ref[...],
                  preferred_element_type=jnp.float32)
    out = out + b3_ref[...]

    # Full lane-dense store, then overwrite only the single 128-lane block that
    # contains classifier_output_idx with the selective sigmoid (EUP work stays
    # one lane-block wide regardless of the padded output width).
    o_ref[...] = out.astype(o_ref.dtype)
    blk = (classifier_output_idx // _LANE) * _LANE
    seg = out[:, blk:blk + _LANE]
    col = jax.lax.broadcasted_iota(jnp.int32, seg.shape, dimension=1)
    seg = jnp.where(col == (classifier_output_idx % _LANE),
                    jax.nn.sigmoid(seg), seg)
    o_ref[:, blk:blk + _LANE] = seg.astype(o_ref.dtype)


def prepare_params(params, compute_dtype=jnp.bfloat16):
    """One-time parameter prep (hoisted out of the forward):
       cast weights to the MXU compute dtype, lane-pad the output dim of W3/b3,
       keep biases in f32.  Weights are stored as [in_features, out_features]."""
    out_dim = params["w3"].shape[1]
    out_pad = _round_up(out_dim, _LANE)
    w3, b3 = params["w3"], params["b3"]
    if out_pad != out_dim:
        w3 = jnp.pad(w3, ((0, 0), (0, out_pad - out_dim)))
        b3 = jnp.pad(b3, ((0, 0), (0, out_pad - out_dim)))
    return {
        "w1": params["w1"].astype(compute_dtype),
        "b1": params["b1"].astype(jnp.float32),
        "w2": params["w2"].astype(compute_dtype),
        "b2": params["b2"].astype(jnp.float32),
        "w3": w3.astype(compute_dtype),
        "b3": b3.astype(jnp.float32),
    }


def classifier_forward(x, prepared, out_dim: int, classifier_output_idx: int = 0, *,
                       tile_b: int = 512, compute_dtype=jnp.bfloat16):
    """Pallas forward.

    x:        [B, input_dim] float32 (cast to compute_dtype inside the kernel).
    prepared: output of prepare_params().
    out_dim:  logical (unpadded) number of output columns.
    """
    assert 0 <= classifier_output_idx < out_dim
    B, input_dim = x.shape
    hidden = prepared["w1"].shape[1]
    out_pad = prepared["w3"].shape[1]

    # ---- Batch tiling: 16-aligned (bf16 sublane packing), capped by tile_b;
    # ---- ensure >= 2 grid steps when B permits so both v7x TCs get work.
    tb = max(_TILE_ALIGN,
             min(_round_up(tile_b, _TILE_ALIGN), _round_up(B, _TILE_ALIGN)))
    if B > _TILE_ALIGN and pl.cdiv(B, tb) < 2:
        tb = _round_up(pl.cdiv(B, 2), _TILE_ALIGN)
    b_pad = _round_up(B, tb)
    if b_pad != B:
        x = jnp.pad(x, ((0, b_pad - B), (0, 0)))
    grid = (b_pad // tb,)

    # ---- VMEM budget: single-buffered resident weights + double-buffered
    # ---- x/out tiles + f32 intermediates + headroom (capped for v7x's 64 MiB).
    w_bytes = sum(int(v.size) * v.dtype.itemsize for v in prepared.values())
    tile_bytes = (2 * tb * input_dim * x.dtype.itemsize      # x tiles (f32, 2 bufs)
                  + 2 * tb * out_pad * 4                     # out tiles (f32, 2 bufs)
                  + 4 * tb * hidden * 4)                     # intermediates
    vmem_limit = int(1.25 * (w_bytes + tile_bytes)) + (4 << 20)
    vmem_limit = max(32 << 20, min(vmem_limit, 64 << 20))

    # Constant-index (resident) blocks: single-buffered (no pointless double buffer).
    const_spec = lambda shape: pl.BlockSpec(shape, lambda i: (0, 0),
                                            pipeline_mode=pl.Buffered(1))

    kernel = functools.partial(_classifier_kernel,
                               classifier_output_idx=classifier_output_idx,
                               compute_dtype=compute_dtype)

    out = pl.pallas_call(
        kernel,
        out_shape=jax.ShapeDtypeStruct((b_pad, out_pad), jnp.float32),
        grid=grid,
        in_specs=[
            pl.BlockSpec((tb, input_dim), lambda i: (i, 0)),  # x tile (f32)
            const_spec((input_dim, hidden)),                  # W1 (resident)
            const_spec((1, hidden)),                          # b1
            const_spec((hidden, hidden)),                     # W2
            const_spec((1, hidden)),                          # b2
            const_spec((hidden, out_pad)),                    # W3 (lane-padded N)
            const_spec((1, out_pad)),                         # b3
        ],
        out_specs=pl.BlockSpec((tb, out_pad), lambda i: (i, 0)),
        compiler_params=pltpu.CompilerParams(
            dimension_semantics=("parallel",),
            vmem_limit_bytes=vmem_limit),
    )(x, prepared["w1"], prepared["b1"], prepared["w2"], prepared["b2"],
      prepared["w3"], prepared["b3"])

    return out[:B, :out_dim]


def init_params(key, input_dim, hidden_size, output_dim):
    """Deterministic init matching nn.Linear shapes (weights stored as [in, out])."""
    ks = jax.random.split(key, 6)

    def linear(kw, kb, fan_in, fan_out):
        bound = 1.0 / jnp.sqrt(fan_in)
        w = jax.random.uniform(kw, (fan_in, fan_out), jnp.float32, -bound, bound)
        b = jax.random.uniform(kb, (1, fan_out), jnp.float32, -bound, bound)
        return w, b

    w1, b1 = linear(ks[0], ks[1], input_dim, hidden_size)
    w2, b2 = linear(ks[2], ks[3], hidden_size, hidden_size)
    w3, b3 = linear(ks[4], ks[5], hidden_size, output_dim)
    return {"w1": w1, "b1": b1, "w2": w2, "b2": b2, "w3": w3, "b3": b3}


def reference_forward(x, params, classifier_output_idx: int = 0):
    """Pure-JAX f32 reference of the PyTorch forward."""
    h = jnp.maximum(x @ params["w1"] + params["b1"], 0.0)
    h = jnp.maximum(h @ params["w2"] + params["b2"], 0.0)
    out = h @ params["w3"] + params["b3"]
    return out.at[:, classifier_output_idx].set(
        jax.nn.sigmoid(out[:, classifier_output_idx]))


def reference_forward_cast(x, params, classifier_output_idx: int, dtype):
    """Reference that mimics the kernel's bf16-operand / f32-accumulate numerics."""
    c = lambda a: a.astype(dtype).astype(jnp.float32)
    h = jnp.maximum(c(x) @ c(params["w1"]) + params["b1"], 0.0)
    h = jnp.maximum(c(h) @ c(params["w2"]) + params["b2"], 0.0)
    out = c(h) @ c(params["w3"]) + params["b3"]
    return out.at[:, classifier_output_idx].set(
        jax.nn.sigmoid(out[:, classifier_output_idx]))


if __name__ == "__main__":
    # Shapes consistent with the module: input_dim=32, hidden_size=128,
    # output_dim=4, classifier_output_idx=0, layers=2.  B=200 exercises the
    # 2-step parallel batch grid plus batch padding.
    key = jax.random.PRNGKey(0)
    k_x, k_p = jax.random.split(key)

    B, input_dim, hidden_size, output_dim = 200, 32, 128, 4
    classifier_output_idx = 0

    x = jax.random.normal(k_x, (B, input_dim), dtype=jnp.float32)
    params = init_params(k_p, input_dim, hidden_size, output_dim)
    prepared = prepare_params(params)   # one-time cast/pad, hoisted out of forward

    out = classifier_forward(x, prepared, output_dim, classifier_output_idx,
                             tile_b=512)
    out = jax.block_until_ready(out)
    assert out.shape == (B, output_dim)

    # Tight check against a numerics-matched (bf16-operand) reference.
    ref_cast = reference_forward_cast(x, params, classifier_output_idx, jnp.bfloat16)
    assert jnp.allclose(out, ref_cast, atol=1e-3, rtol=1e-3), \
        "mismatch vs bf16-consistent reference"

    # Loose check against the full-f32 PyTorch-equivalent reference.
    ref_f32 = reference_forward(x, params, classifier_output_idx)
    assert jnp.allclose(out, ref_f32, atol=5e-2, rtol=5e-2), \
        "mismatch vs f32 reference"

    print("KERNEL_OK")
</pallas_src>

<mosaic_0001>
module attributes {stable_mosaic.version = 11 : i64} {
  func.func @_classifier_kernel(%arg0: i32, %arg1: memref<112x32xf32, #tpu.memory_space<vmem>>, %arg2: memref<32x128xbf16, #tpu.memory_space<vmem>>, %arg3: memref<1x128xf32, #tpu.memory_space<vmem>>, %arg4: memref<128x128xbf16, #tpu.memory_space<vmem>>, %arg5: memref<1x128xf32, #tpu.memory_space<vmem>>, %arg6: memref<128x128xbf16, #tpu.memory_space<vmem>>, %arg7: memref<1x128xf32, #tpu.memory_space<vmem>>, %arg8: memref<112x128xf32, #tpu.memory_space<vmem>>) attributes {dimension_semantics = [#tpu.dimension_semantics<parallel>], iteration_bounds = array<i64: 2>, scalar_prefetch = 0 : i64, scratch_operands = 0 : i64, tpu.core_type = #tpu.core_type<tc>, window_params = [{transform_indices = @transform_0, window_bounds = array<i64: 112, 32>}, {pipeline_mode = #tpu.pipeline_mode<synchronous>, transform_indices = @transform_1, window_bounds = array<i64: 32, 128>}, {pipeline_mode = #tpu.pipeline_mode<synchronous>, transform_indices = @transform_2, window_bounds = array<i64: 1, 128>}, {pipeline_mode = #tpu.pipeline_mode<synchronous>, transform_indices = @transform_3, window_bounds = array<i64: 128, 128>}, {pipeline_mode = #tpu.pipeline_mode<synchronous>, transform_indices = @transform_4, window_bounds = array<i64: 1, 128>}, {pipeline_mode = #tpu.pipeline_mode<synchronous>, transform_indices = @transform_5, window_bounds = array<i64: 128, 128>}, {pipeline_mode = #tpu.pipeline_mode<synchronous>, transform_indices = @transform_6, window_bounds = array<i64: 1, 128>}, {transform_indices = @transform_7, window_bounds = array<i64: 112, 128>}]} {
    %c0 = arith.constant 0 : index
    %c0_0 = arith.constant 0 : index
    %0 = vector.load %arg1[%c0, %c0_0] : memref<112x32xf32, #tpu.memory_space<vmem>>, vector<112x32xf32>
    %1 = arith.truncf %0 : vector<112x32xf32> to vector<112x32xbf16>
    %c0_1 = arith.constant 0 : index
    %c0_2 = arith.constant 0 : index
    %2 = vector.load %arg2[%c0_1, %c0_2] : memref<32x128xbf16, #tpu.memory_space<vmem>>, vector<32x128xbf16>
    %cst = arith.constant dense<0.000000e+00> : vector<112x128xf32>
    %3 = tpu.matmul %1, %2, %cst {dimension_numbers = #tpu.dot_dimension_numbers<[1], [0], [0], [1], [0, 0, 1, 1], [], []>} : vector<112x32xbf16>, vector<32x128xbf16>, vector<112x128xf32> -> vector<112x128xf32>
    %c0_3 = arith.constant 0 : index
    %c0_4 = arith.constant 0 : index
    %4 = vector.load %arg3[%c0_3, %c0_4] : memref<1x128xf32, #tpu.memory_space<vmem>>, vector<1x128xf32>
    %5 = vector.broadcast %4 : vector<1x128xf32> to vector<112x128xf32>
    %6 = arith.addf %3, %5 : vector<112x128xf32>
    %cst_5 = arith.constant 0.000000e+00 : f32
    %7 = vector.broadcast %cst_5 : f32 to vector<112x128xf32>
    %8 = arith.maximumf %6, %7 : vector<112x128xf32>
    %9 = arith.truncf %8 : vector<112x128xf32> to vector<112x128xbf16>
    %c0_6 = arith.constant 0 : index
    %c0_7 = arith.constant 0 : index
    %10 = vector.load %arg4[%c0_6, %c0_7] : memref<128x128xbf16, #tpu.memory_space<vmem>>, vector<128x128xbf16>
    %cst_8 = arith.constant dense<0.000000e+00> : vector<112x128xf32>
    %11 = tpu.matmul %9, %10, %cst_8 {dimension_numbers = #tpu.dot_dimension_numbers<[1], [0], [0], [1], [0, 0, 1, 1], [], []>} : vector<112x128xbf16>, vector<128x128xbf16>, vector<112x128xf32> -> vector<112x128xf32>
    %c0_9 = arith.constant 0 : index
    %c0_10 = arith.constant 0 : index
    %12 = vector.load %arg5[%c0_9, %c0_10] : memref<1x128xf32, #tpu.memory_space<vmem>>, vector<1x128xf32>
    %13 = vector.broadcast %12 : vector<1x128xf32> to vector<112x128xf32>
    %14 = arith.addf %11, %13 : vector<112x128xf32>
    %cst_11 = arith.constant 0.000000e+00 : f32
    %15 = vector.broadcast %cst_11 : f32 to vector<112x128xf32>
    %16 = arith.maximumf %14, %15 : vector<112x128xf32>
    %17 = arith.truncf %16 : vector<112x128xf32> to vector<112x128xbf16>
    %c0_12 = arith.constant 0 : index
    %c0_13 = arith.constant 0 : index
    %18 = vector.load %arg6[%c0_12, %c0_13] : memref<128x128xbf16, #tpu.memory_space<vmem>>, vector<128x128xbf16>
    %cst_14 = arith.constant dense<0.000000e+00> : vector<112x128xf32>
    %19 = tpu.matmul %17, %18, %cst_14 {dimension_numbers = #tpu.dot_dimension_numbers<[1], [0], [0], [1], [0, 0, 1, 1], [], []>} : vector<112x128xbf16>, vector<128x128xbf16>, vector<112x128xf32> -> vector<112x128xf32>
    %c0_15 = arith.constant 0 : index
    %c0_16 = arith.constant 0 : index
    %20 = vector.load %arg7[%c0_15, %c0_16] : memref<1x128xf32, #tpu.memory_space<vmem>>, vector<1x128xf32>
    %21 = vector.broadcast %20 : vector<1x128xf32> to vector<112x128xf32>
    %22 = arith.addf %19, %21 : vector<112x128xf32>
    %c0_17 = arith.constant 0 : index
    %c0_18 = arith.constant 0 : index
    %23 = vector.load %arg8[%c0_17, %c0_18] : memref<112x128xf32, #tpu.memory_space<vmem>>, vector<112x128xf32>
    tpu.vector_store %arg8[%c0_17, %c0_18], %22 {strides = array<i32>} : memref<112x128xf32, #tpu.memory_space<vmem>>, vector<112x128xf32>,
    %24 = tpu.iota {dimensions = array<i32: 1>} : vector<112x128xi32>
    %c0_i32 = arith.constant 0 : i32
    %25 = vector.broadcast %c0_i32 : i32 to vector<112x128xi32>
    %26 = arith.cmpi eq, %24, %25 : vector<112x128xi32>
    %27 = arith.negf %22 : vector<112x128xf32>
    %28 = math.exp %27 : vector<112x128xf32>
    %cst_19 = arith.constant 1.000000e+00 : f32
    %29 = vector.broadcast %cst_19 : f32 to vector<112x128xf32>
    %30 = arith.addf %29, %28 : vector<112x128xf32>
    %31 = arith.divf %29, %30 : vector<112x128xf32>
    %32 = arith.select %26, %31, %22 : vector<112x128xi1>, vector<112x128xf32>
    %c0_20 = arith.constant 0 : index
    %c0_21 = arith.constant 0 : index
    %33 = vector.load %arg8[%c0_20, %c0_21] : memref<112x128xf32, #tpu.memory_space<vmem>>, vector<112x128xf32>
    tpu.vector_store %arg8[%c0_20, %c0_21], %32 {strides = array<i32>} : memref<112x128xf32, #tpu.memory_space<vmem>>, vector<112x128xf32>,
    return
  }
  func.func @transform_0(%arg0: i32) -> (i32, i32) {
    %c0_i32 = arith.constant 0 : i32
    %c0_i32_0 = arith.constant 0 : i32
    return %arg0, %c0_i32 : i32, i32
  }
  func.func @transform_1(%arg0: i32) -> (i32, i32) {
    %c0_i32 = arith.constant 0 : i32
    %c0_i32_0 = arith.constant 0 : i32
    %c0_i32_1 = arith.constant 0 : i32
    return %c0_i32, %c0_i32_0 : i32, i32
  }
  func.func @transform_2(%arg0: i32) -> (i32, i32) {
    %c0_i32 = arith.constant 0 : i32
    %c0_i32_0 = arith.constant 0 : i32
    %c0_i32_1 = arith.constant 0 : i32
    return %c0_i32, %c0_i32_0 : i32, i32
  }
  func.func @transform_3(%arg0: i32) -> (i32, i32) {
    %c0_i32 = arith.constant 0 : i32
    %c0_i32_0 = arith.constant 0 : i32
    %c0_i32_1 = arith.constant 0 : i32
    return %c0_i32, %c0_i32_0 : i32, i32
  }
  func.func @transform_4(%arg0: i32) -> (i32, i32) {
    %c0_i32 = arith.constant 0 : i32
    %c0_i32_0 = arith.constant 0 : i32
    %c0_i32_1 = arith.constant 0 : i32
    return %c0_i32, %c0_i32_0 : i32, i32
  }
  func.func @transform_5(%arg0: i32) -> (i32, i32) {
    %c0_i32 = arith.constant 0 : i32
    %c0_i32_0 = arith.constant 0 : i32
    %c0_i32_1 = arith.constant 0 : i32
    return %c0_i32, %c0_i32_0 : i32, i32
  }
  func.func @transform_6(%arg0: i32) -> (i32, i32) {
    %c0_i32 = arith.constant 0 : i32
    %c0_i32_0 = arith.constant 0 : i32
    %c0_i32_1 = arith.constant 0 : i32
    return %c0_i32, %c0_i32_0 : i32, i32
  }
  func.func @transform_7(%arg0: i32) -> (i32, i32) {
    %c0_i32 = arith.constant 0 : i32
    %c0_i32_0 = arith.constant 0 : i32
    return %arg0, %c0_i32 : i32, i32
  }
}

</mosaic_0001>

<llo_original>
// kernel: tpu_custom_call.1
$region0: #{tpu_custom_call.1}
  #allocation0 [shape = 'u32[]', space=smem, size = 0x4, offset = 0x4, fixed_abs, tag = 'smem constant byte address 0x4 - core index']
  #allocation1 [shape = 'u32[72,128]{1,0:T(1,128)}', space=vmem, size = 0x9000, scoped, tag = 'internal scratch']
  %s0 = inlined_call_operand.vmem [shape: f32[224,32], index: 0, kind: input, shape index: {}]
  %s1 = inlined_call_operand.vmem [shape: bf16[32,128], index: 1, kind: input, shape index: {}]
  %s2 = inlined_call_operand.vmem [shape: f32[1,128], index: 2, kind: input, shape index: {}]
  %s3 = inlined_call_operand.vmem [shape: bf16[128,128], index: 3, kind: input, shape index: {}]
  %s4 = inlined_call_operand.vmem [shape: f32[1,128], index: 4, kind: input, shape index: {}]
  %s5 = inlined_call_operand.vmem [shape: bf16[128,128], index: 5, kind: input, shape index: {}]
  %s6 = inlined_call_operand.vmem [shape: f32[1,128], index: 6, kind: input, shape index: {}]
  %s7 = inlined_call_operand.hbm [shape: f32[224,128], index: 7, kind: output, shape index: {}]
  %s8 = sld [smem:[#allocation0]]
  $region61: #{tpu_custom_call.1} parent=0
    _
  %s10 = ssub.s32 1, %s8
  %s11 = scalar_select 0, %s10, %s8
  $region1: #{tpu_custom_call.1} parent=0
    #allocation2 [shape = 'u8[114688]{0}', space=vmem, size = 0x1c000, scoped, tag = 'output window, operand 0']
    #allocation3 [shape = 's32[2]{0}', space=sflag, size = 0x8, scoped, tag = 'scoped memory for tpu_custom_call.1']
    %12 = vsyncpa [#allocation3], 0
    %s13 = scalar_lea.sflag [#allocation3], 1
    %14 = vsyncpa %s13, 0
    loop: start=0, step=1, limit=4
    $region2: #{tpu_custom_call.1} parent=1 // loop_pre_header
      _
    $region3: #{tpu_custom_call.1} parent=1 // loop_header
      %s16 = sphi 0, %s20
      %p17 = scmp.ge.s32.totalorder %s16, 4
      %s26 = sphi 0, %s28
      %s29 = sphi 0, %s26
      %s30 = sphi 0, %s29
      %s46 = sphi 0, %s30
      %s50 = sphi 0, %s50
      %s52 = sphi 0, %s50
      %s53 = sphi 0, %s52
      %s67 = sphi 0, %s53
      %s71 = sphi 0, %s71
      %s73 = sphi 0, %s71
      %s74 = sphi 0, %s73
      %s88 = sphi 0, %s74
      %s92 = sphi 0, %s92
      %s94 = sphi 0, %s92
      %s95 = sphi 0, %s94
      %s109 = sphi 0, %s95
      %s113 = sphi 0, %s113
      %s115 = sphi 0, %s113
      %s116 = sphi 0, %s115
      %s130 = sphi 0, %s116
      %s134 = sphi 0, %s134
      %s136 = sphi 0, %s134
      %s137 = sphi 0, %s136
      %s151 = sphi 0, %s137
      %s155 = sphi 0, %s155
      %s157 = sphi 0, %s155
      %s158 = sphi 0, %s157
      %s172 = sphi 0, %s158
      %s178 = sphi 0, %s180
      %s181 = sphi 0, %s178
      %s182 = sphi 0, %s181
      %s198 = sphi 0, %s182
    $region4: #{tpu_custom_call.1} parent=1 // loop_header_branch
      %19 = sbr.rel (%p17) target = $region8
    $region5: #{tpu_custom_call.1} parent=1 // loop_body
      %s21 = ssub.s32 %s16, 1
      %s22 = ssub.s32 %s16, 2
      %s23 = sadd.s32 %s16, 1
      %s24 = ssub.s32 %s16, %s23
      %p25 = scmp.eq.s32.totalorder %s24, 0
      %s27 = sadd.s32 %s26, 1
      %s28 = scalar_select %p25, %s26, %s27
      %p31 = pneg %p25
      %p32 = scmp.eq.s32.totalorder %s16, 1
      %p33 = por %p31, %p32
      %p34 = scmp.ne.s32.totalorder %s26, %s29
      %p35 = scmp.eq.s32.totalorder %s16, 0
      %p36 = por %p34, %p35
      %p37 = scmp.ne.s32.totalorder %s26, %s29
      %p38 = scmp.eq.s32.totalorder %s21, 1
      %p39 = por %p37, %p38
      %p40 = scmp.ne.s32.totalorder %s29, %s30
      %p41 = scmp.eq.s32.totalorder %s21, 0
      %p42 = por %p40, %p41
      %p43 = scmp.ne.s32.totalorder %s29, %s30
      %p44 = scmp.eq.s32.totalorder %s22, 1
      %p45 = por %p43, %p44
      %p47 = scmp.ne.s32.totalorder %s30, %s46
      %p48 = scmp.eq.s32.totalorder %s22, 0
      %p49 = por %p47, %p48
      %s51 = sadd.s32 %s50, 1
      %p54 = scmp.eq.s32.totalorder %s16, 1
      %p55 = scmp.ne.s32.totalorder %s50, %s52
      %p56 = scmp.eq.s32.totalorder %s16, 0
      %p57 = por %p55, %p56
      %p58 = scmp.ne.s32.totalorder %s50, %s52
      %p59 = scmp.eq.s32.totalorder %s21, 1
      %p60 = por %p58, %p59
      %p61 = scmp.ne.s32.totalorder %s52, %s53
      %p62 = scmp.eq.s32.totalorder %s21, 0
      %p63 = por %p61, %p62
      %p64 = scmp.ne.s32.totalorder %s52, %s53
      %p65 = scmp.eq.s32.totalorder %s22, 1
      %p66 = por %p64, %p65
      %p68 = scmp.ne.s32.totalorder %s53, %s67
      %p69 = scmp.eq.s32.totalorder %s22, 0
      %p70 = por %p68, %p69
      %s72 = sadd.s32 %s71, 1
      %p75 = scmp.eq.s32.totalorder %s16, 1
      %p76 = scmp.ne.s32.totalorder %s71, %s73
      %p77 = scmp.eq.s32.totalorder %s16, 0
      %p78 = por %p76, %p77
      %p79 = scmp.ne.s32.totalorder %s71, %s73
      %p80 = scmp.eq.s32.totalorder %s21, 1
      %p81 = por %p79, %p80
      %p82 = scmp.ne.s32.totalorder %s73, %s74
      %p83 = scmp.eq.s32.totalorder %s21, 0
      %p84 = por %p82, %p83
      %p85 = scmp.ne.s32.totalorder %s73, %s74
      %p86 = scmp.eq.s32.totalorder %s22, 1
      %p87 = por %p85, %p86
      %p89 = scmp.ne.s32.totalorder %s74, %s88
      %p90 = scmp.eq.s32.totalorder %s22, 0
      %p91 = por %p89, %p90
      %s93 = sadd.s32 %s92, 1
      %p96 = scmp.eq.s32.totalorder %s16, 1
      %p97 = scmp.ne.s32.totalorder %s92, %s94
      %p98 = scmp.eq.s32.totalorder %s16, 0
      %p99 = por %p97, %p98
      %p100 = scmp.ne.s32.totalorder %s92, %s94
      %p101 = scmp.eq.s32.totalorder %s21, 1
      %p102 = por %p100, %p101
      %p103 = scmp.ne.s32.totalorder %s94, %s95
      %p104 = scmp.eq.s32.totalorder %s21, 0
      %p105 = por %p103, %p104
      %p106 = scmp.ne.s32.totalorder %s94, %s95
      %p107 = scmp.eq.s32.totalorder %s22, 1
      %p108 = por %p106, %p107
      %p110 = scmp.ne.s32.totalorder %s95, %s109
      %p111 = scmp.eq.s32.totalorder %s22, 0
      %p112 = por %p110, %p111
      %s114 = sadd.s32 %s113, 1
      %p117 = scmp.eq.s32.totalorder %s16, 1
      %p118 = scmp.ne.s32.totalorder %s113, %s115
      %p119 = scmp.eq.s32.totalorder %s16, 0
      %p120 = por %p118, %p119
      %p121 = scmp.ne.s32.totalorder %s113, %s115
      %p122 = scmp.eq.s32.totalorder %s21, 1
      %p123 = por %p121, %p122
      %p124 = scmp.ne.s32.totalorder %s115, %s116
      %p125 = scmp.eq.s32.totalorder %s21, 0
      %p126 = por %p124, %p125
      %p127 = scmp.ne.s32.totalorder %s115, %s116
      %p128 = scmp.eq.s32.totalorder %s22, 1
      %p129 = por %p127, %p128
      %p131 = scmp.ne.s32.totalorder %s116, %s130
      %p132 = scmp.eq.s32.totalorder %s22, 0
      %p133 = por %p131, %p132
      %s135 = sadd.s32 %s134, 1
      %p138 = scmp.eq.s32.totalorder %s16, 1
      %p139 = scmp.ne.s32.totalorder %s134, %s136
      %p140 = scmp.eq.s32.totalorder %s16, 0
      %p141 = por %p139, %p140
      %p142 = scmp.ne.s32.totalorder %s134, %s136
      %p143 = scmp.eq.s32.totalorder %s21, 1
      %p144 = por %p142, %p143
      %p145 = scmp.ne.s32.totalorder %s136, %s137
      %p146 = scmp.eq.s32.totalorder %s21, 0
      %p147 = por %p145, %p146
      %p148 = scmp.ne.s32.totalorder %s136, %s137
      %p149 = scmp.eq.s32.totalorder %s22, 1
      %p150 = por %p148, %p149
      %p152 = scmp.ne.s32.totalorder %s137, %s151
      %p153 = scmp.eq.s32.totalorder %s22, 0
      %p154 = por %p152, %p153
      %s156 = sadd.s32 %s155, 1
      %p159 = scmp.eq.s32.totalorder %s16, 1
      %p160 = scmp.ne.s32.totalorder %s155, %s157
      %p161 = scmp.eq.s32.totalorder %s16, 0
      %p162 = por %p160, %p161
      %p163 = scmp.ne.s32.totalorder %s155, %s157
      %p164 = scmp.eq.s32.totalorder %s21, 1
      %p165 = por %p163, %p164
      %p166 = scmp.ne.s32.totalorder %s157, %s158
      %p167 = scmp.eq.s32.totalorder %s21, 0
      %p168 = por %p166, %p167
      %p169 = scmp.ne.s32.totalorder %s157, %s158
      %p170 = scmp.eq.s32.totalorder %s22, 1
      %p171 = por %p169, %p170
      %p173 = scmp.ne.s32.totalorder %s158, %s172
      %p174 = scmp.eq.s32.totalorder %s22, 0
      %p175 = por %p173, %p174
      %s176 = ssub.s32 %s16, %s23
      %p177 = scmp.eq.s32.totalorder %s176, 0
      %s179 = sadd.s32 %s178, 1
      %s180 = scalar_select %p177, %s178, %s179
      %p183 = pneg %p177
      %p184 = scmp.eq.s32.totalorder %s16, 1
      %p185 = por %p183, %p184
      %p186 = scmp.ne.s32.totalorder %s178, %s181
      %p187 = scmp.eq.s32.totalorder %s16, 0
      %p188 = por %p186, %p187
      %p189 = scmp.ne.s32.totalorder %s178, %s181
      %p190 = scmp.eq.s32.totalorder %s21, 1
      %p191 = por %p189, %p190
      %p192 = scmp.ne.s32.totalorder %s181, %s182
      %p193 = scmp.eq.s32.totalorder %s21, 0
      %p194 = por %p192, %p193
      %p195 = scmp.ne.s32.totalorder %s181, %s182
      %p196 = scmp.eq.s32.totalorder %s22, 1
      %p197 = por %p195, %p196
      %p199 = scmp.ne.s32.totalorder %s182, %s198
      %p200 = scmp.eq.s32.totalorder %s22, 0
      %p201 = por %p199, %p200
      %p202 = scmp.le.s32.totalorder 1, %s16
      %p203 = scmp.lt.s32.totalorder %s16, 3
      %p204 = pnand %p202, %p203
      %p205 = pneg %p204
      // Predicated region
      $region9: #{tpu_custom_call.1} parent=5 // pred_check
        _
      $region10: #{tpu_custom_call.1} parent=5 // pred_check_branch
        %207 = sbr.rel (%p204) target = $region12
      $region11: #{tpu_custom_call.1} parent=5 // pred_region
        %s208 = ssub.s32 %s16, 1
        // Predicated region
        $region13: #{tpu_custom_call.1} parent=11 // pred_check
          %p209 = pneg %p63
        $region14: #{tpu_custom_call.1} parent=11 // pred_check_branch
          %211 = sbr.rel (%p209) target = $region16
        $region15: #{tpu_custom_call.1} parent=11 // pred_region
          _
        $region16: #{tpu_custom_call.1} parent=11 // pred_fallthru
          _
        // Predicated region
        $region17: #{tpu_custom_call.1} parent=11 // pred_check
          %p212 = pneg %p84
        $region18: #{tpu_custom_call.1} parent=11 // pred_check_branch
          %214 = sbr.rel (%p212) target = $region20
        $region19: #{tpu_custom_call.1} parent=11 // pred_region
          _
        $region20: #{tpu_custom_call.1} parent=11 // pred_fallthru
          _
        // Predicated region
        $region21: #{tpu_custom_call.1} parent=11 // pred_check
          %p215 = pneg %p105
        $region22: #{tpu_custom_call.1} parent=11 // pred_check_branch
          %217 = sbr.rel (%p215) target = $region24
        $region23: #{tpu_custom_call.1} parent=11 // pred_region
          _
        $region24: #{tpu_custom_call.1} parent=11 // pred_fallthru
          _
        // Predicated region
        $region25: #{tpu_custom_call.1} parent=11 // pred_check
          %p218 = pneg %p126
        $region26: #{tpu_custom_call.1} parent=11 // pred_check_branch
          %220 = sbr.rel (%p218) target = $region28
        $region27: #{tpu_custom_call.1} parent=11 // pred_region
          _
        $region28: #{tpu_custom_call.1} parent=11 // pred_fallthru
          _
        // Predicated region
        $region29: #{tpu_custom_call.1} parent=11 // pred_check
          %p221 = pneg %p147
        $region30: #{tpu_custom_call.1} parent=11 // pred_check_branch
          %223 = sbr.rel (%p221) target = $region32
        $region31: #{tpu_custom_call.1} parent=11 // pred_region
          _
        $region32: #{tpu_custom_call.1} parent=11 // pred_fallthru
          _
        // Predicated region
        $region33: #{tpu_custom_call.1} parent=11 // pred_check
          %p224 = pneg %p168
        $region34: #{tpu_custom_call.1} parent=11 // pred_check_branch
          %226 = sbr.rel (%p224) target = $region36
        $region35: #{tpu_custom_call.1} parent=11 // pred_region
          _
        $region36: #{tpu_custom_call.1} parent=11 // pred_fallthru
          _
      $region12: #{tpu_custom_call.1} parent=5 // pred_fallthru
        _
      %p227 = scmp.lt.s32.totalorder %s16, 2
      // Predicated region
      $region37: #{tpu_custom_call.1} parent=5 // pred_check
        %p228 = pneg %p227
      $region38: #{tpu_custom_call.1} parent=5 // pred_check_branch
        %230 = sbr.rel (%p228) target = $region40
      $region39: #{tpu_custom_call.1} parent=5 // pred_region
        // Predicated region
        $region41: #{tpu_custom_call.1} parent=39 // pred_check
          %p231 = pneg %p36
        $region42: #{tpu_custom_call.1} parent=39 // pred_check_branch
          %233 = sbr.rel (%p231) target = $region44
        $region43: #{tpu_custom_call.1} parent=39 // pred_region
          %s234 = smul.u32 14, %s16
          %p235 = scmp.lt.s32.totalorder %s234, 27
          %s236 = scalar_select %p235, %s234, 27
          %s237 = smul.addr %s236, 8
          %s238 = scalar_lea.vmem %s0, %s237
          %s239 = smul.u32 14, %s16
        $region44: #{tpu_custom_call.1} parent=39 // pred_fallthru
          _
      $region40: #{tpu_custom_call.1} parent=5 // pred_fallthru
        _
      %p240 = scmp.le.s32.totalorder 1, %s16
      %p241 = scmp.lt.s32.totalorder %s16, 3
      %p242 = pnand %p240, %p241
      %p243 = pneg %p242
      // Predicated region
      $region45: #{tpu_custom_call.1} parent=5 // pred_check
        _
      $region46: #{tpu_custom_call.1} parent=5 // pred_check_branch
        %245 = sbr.rel (%p242) target = $region48
      $region47: #{tpu_custom_call.1} parent=5 // pred_region
        %s246 = ssub.s32 %s16, 1
        %s247 = smul.u32 14, %s21
        %p248 = scmp.lt.s32.totalorder %s247, 27
        %s249 = scalar_select %p248, %s247, 27
        %s250 = smul.addr %s249, 8
        %s251 = scalar_lea.vmem %s0, %s250
        %p252 = pneg %p42
        %p253 = pneg %p39
        %p254 = pneg %p63
        %p255 = pneg %p60
        %p256 = pneg %p84
        %p257 = pneg %p81
        %p258 = pneg %p105
        %p259 = pneg %p102
        %p260 = pneg %p126
        %p261 = pneg %p123
        %p262 = pneg %p147
        %p263 = pneg %p144
        %p264 = pneg %p168
        %p265 = pneg %p165
        %p266 = pneg %p194
        %p267 = pneg %p191
        %s268 = sand.u32 %s181, 1
        %s269 = scalar_lea.sflag [#allocation3], %s268
        %s270 = sand.u32 %s181, 1
        %s271 = smul.addr %s270, 112
        %s272 = scalar_lea.vmem [#allocation2], %s271
        %s273 = smul.u32 14, %s21
        %p274 = scmp.lt.s32.totalorder %s273, 27
        %s275 = scalar_select %p274, %s273, 27
        %s276 = smul.addr %s275, 8
        %s277 = scalar_lea.vmem %s0, %s276
        %s278 = smul.u32 14, %s21
        %s279 = smul.u32 14, %s21
        %v281 = vld [vmem:[%s277] sm:$0xff]
        %v282 = vld [vmem:[%s277 + $0x8] sm:$0xff]
        %v283 = vld [vmem:[%s277 + $0x10] sm:$0xff]
        %v284 = vld [vmem:[%s277 + $0x18] sm:$0xff]
        %v285 = vld [vmem:[%s277 + $0x20] sm:$0xff]
        %v286 = vld [vmem:[%s277 + $0x28] sm:$0xff]
        %v287 = vld [vmem:[%s277 + $0x30] sm:$0xff]
        %v288 = vld [vmem:[%s277 + $0x38] sm:$0xff]
        %v289 = vld [vmem:[%s277 + $0x40] sm:$0xff]
        %v290 = vld [vmem:[%s277 + $0x48] sm:$0xff]
        %v291 = vld [vmem:[%s277 + $0x50] sm:$0xff]
        %v292 = vld [vmem:[%s277 + $0x58] sm:$0xff]
        %v293 = vld [vmem:[%s277 + $0x60] sm:$0xff]
        %v294 = vld [vmem:[%s277 + $0x68] sm:$0xff]
        %v295 = vpack.c.bf16 %v282, %v281
        %v296 = vpack.c.bf16 %v284, %v283
        %v297 = vpack.c.bf16 %v286, %v285
        %v298 = vpack.c.bf16 %v288, %v287
        %v299 = vpack.c.bf16 %v290, %v289
        %v300 = vpack.c.bf16 %v292, %v291
        %v301 = vpack.c.bf16 %v294, %v293
        %v302 = vld [vmem:[%s1] sm:$0xf]
        %v303 = vld [vmem:[%s1 + $0x4] sm:$0xf]
        %v304 = vld [vmem:[%s1 + $0x8] sm:$0xf]
        %v305 = vld [vmem:[%s1 + $0xc] sm:$0xf]
        %v306 = vld [vmem:[%s2] sm:$0x1]
        %v308 = vperm.slane %v306, 0
        %v314 = vunpack.c.l.b16 %v302
        %v315 = vunpack.c.l.b16 %v303
        %v316 = vunpack.c.l.b16 %v304
        %v317 = vunpack.c.l.b16 %v305
        %v318 = vpack.c.b16 %v315, %v314
        %v319 = vpack.c.b16 %v317, %v316
        %vm322 = vcmask 261120
        %v324 = vsel %vm322, %v295, 0
        %v327 = vsel %vm322, %v296, 0
        %v330 = vsel %vm322, %v297, 0
        %v333 = vsel %vm322, %v298, 0
        %v336 = vsel %vm322, %v299, 0
        %v339 = vsel %vm322, %v300, 0
        %v342 = vsel %vm322, %v301, 0
        %344 = vmatpush.bf16.msra.mxu0 0
        %345 = vmatpush.bf16.msra.mxu0 0
        %346 = vmatpush.bf16.msra.mxu0 0
        %347 = vmatpush.bf16.msra.mxu0 0
        %348 = vmatpush.bf16.msra.mxu0 0
        %349 = vmatpush.bf16.msra.mxu0 0
        %350 = vmatpush.bf16.msra.mxu0 %v319
        %351 = vmatpush.bf16.msra.mxu0 %v318
        %352 = vmatmul.bf16.gmra.mxu0 %v324
        %v353 = vpop.f32.mrf.mxu0
        %v354 = vadd.f32 %v308, %v353
        %v355 = vpop.f32.mrf.mxu0
        %v356 = vadd.f32 %v308, %v355
        %357 = vmatmul.bf16.gmra.mxu0 %v327
        %v358 = vpop.f32.mrf.mxu0
        %v359 = vadd.f32 %v308, %v358
        %v360 = vpop.f32.mrf.mxu0
        %v361 = vadd.f32 %v308, %v360
        %362 = vmatmul.bf16.gmra.mxu0 %v330
        %v363 = vpop.f32.mrf.mxu0
        %v364 = vadd.f32 %v308, %v363
        %v365 = vpop.f32.mrf.mxu0
        %v366 = vadd.f32 %v308, %v365
        %367 = vmatmul.bf16.gmra.mxu0 %v333
        %v368 = vpop.f32.mrf.mxu0
        %v369 = vadd.f32 %v308, %v368
        %v370 = vpop.f32.mrf.mxu0
        %v371 = vadd.f32 %v308, %v370
        %372 = vmatmul.bf16.gmra.mxu0 %v336
        %v373 = vpop.f32.mrf.mxu0
        %v374 = vadd.f32 %v308, %v373
        %v375 = vpop.f32.mrf.mxu0
        %v376 = vadd.f32 %v308, %v375
        %377 = vmatmul.bf16.gmra.mxu0 %v339
        %v378 = vpop.f32.mrf.mxu0
        %v379 = vadd.f32 %v308, %v378
        %v380 = vpop.f32.mrf.mxu0
        %v381 = vadd.f32 %v308, %v380
        %382 = vmatmul.bf16.gmra.mxu0 %v342
        %v383 = vpop.f32.mrf.mxu0
        %v384 = vadd.f32 %v308, %v383
        %v385 = vpop.f32.mrf.mxu0
        %v386 = vadd.f32 %v308, %v385
        %387 = vdwg.mxu0
        %v388 = vmax.f32 %v354, 0.0
        %v389 = vmax.f32 %v356, 0.0
        %v390 = vmax.f32 %v359, 0.0
        %v391 = vmax.f32 %v361, 0.0
        %v392 = vmax.f32 %v364, 0.0
        %v393 = vmax.f32 %v366, 0.0
        %v394 = vmax.f32 %v369, 0.0
        %v395 = vmax.f32 %v371, 0.0
        %v396 = vmax.f32 %v374, 0.0
        %v397 = vmax.f32 %v376, 0.0
        %v398 = vmax.f32 %v379, 0.0
        %v399 = vmax.f32 %v381, 0.0
        %v400 = vmax.f32 %v384, 0.0
        %v401 = vmax.f32 %v386, 0.0
        %v402 = vpack.c.bf16 %v389, %v388
        %v403 = vpack.c.bf16 %v391, %v390
        %v404 = vpack.c.bf16 %v393, %v392
        %v405 = vpack.c.bf16 %v395, %v394
        %v406 = vpack.c.bf16 %v397, %v396
        %v407 = vpack.c.bf16 %v399, %v398
        %v408 = vpack.c.bf16 %v401, %v400
        %v409 = vld [vmem:[%s3] sm:$0xf]
        %v410 = vld [vmem:[%s3 + $0x4] sm:$0xf]
        %v411 = vld [vmem:[%s3 + $0x8] sm:$0xf]
        %v412 = vld [vmem:[%s3 + $0xc] sm:$0xf]
        %v413 = vld [vmem:[%s3 + $0x10] sm:$0xf]
        %v414 = vld [vmem:[%s3 + $0x14] sm:$0xf]
        %v415 = vld [vmem:[%s3 + $0x18] sm:$0xf]
        %v416 = vld [vmem:[%s3 + $0x1c] sm:$0xf]
        %v417 = vld [vmem:[%s3 + $0x20] sm:$0xf]
        %v418 = vld [vmem:[%s3 + $0x24] sm:$0xf]
        %v419 = vld [vmem:[%s3 + $0x28] sm:$0xf]
        %v420 = vld [vmem:[%s3 + $0x2c] sm:$0xf]
        %v421 = vld [vmem:[%s3 + $0x30] sm:$0xf]
        %v422 = vld [vmem:[%s3 + $0x34] sm:$0xf]
        %v423 = vld [vmem:[%s3 + $0x38] sm:$0xf]
        %v424 = vld [vmem:[%s3 + $0x3c] sm:$0xf]
        %v425 = vld [vmem:[%s4] sm:$0x1]
        %v427 = vperm.slane %v425, 0
        %v445 = vunpack.c.l.b16 %v409
        %v446 = vunpack.c.l.b16 %v410
        %v447 = vunpack.c.l.b16 %v411
        %v448 = vunpack.c.l.b16 %v412
        %v449 = vunpack.c.l.b16 %v413
        %v450 = vunpack.c.l.b16 %v414
        %v451 = vunpack.c.l.b16 %v415
        %v452 = vunpack.c.l.b16 %v416
        %v453 = vunpack.c.l.b16 %v417
        %v454 = vunpack.c.l.b16 %v418
        %v455 = vunpack.c.l.b16 %v419
        %v456 = vunpack.c.l.b16 %v420
        %v457 = vunpack.c.l.b16 %v421
        %v458 = vunpack.c.l.b16 %v422
        %v459 = vunpack.c.l.b16 %v423
        %v460 = vunpack.c.l.b16 %v424
        %v461 = vpack.c.b16 %v446, %v445
        %v462 = vpack.c.b16 %v448, %v447
        %v463 = vpack.c.b16 %v450, %v449
        %v464 = vpack.c.b16 %v452, %v451
        %v465 = vpack.c.b16 %v454, %v453
        %v466 = vpack.c.b16 %v456, %v455
        %v467 = vpack.c.b16 %v458, %v457
        %v468 = vpack.c.b16 %v460, %v459
        %477 = vmatpush.bf16.msra.mxu0 %v468
        %478 = vmatpush.bf16.msra.mxu0 %v467
        %479 = vmatpush.bf16.msra.mxu0 %v466
        %480 = vmatpush.bf16.msra.mxu0 %v465
        %481 = vmatpush.bf16.msra.mxu0 %v464
        %482 = vmatpush.bf16.msra.mxu0 %v463
        %483 = vmatpush.bf16.msra.mxu0 %v462
        %484 = vmatpush.bf16.msra.mxu0 %v461
        %485 = vmatmul.bf16.gmra.mxu0 %v402
        %v486 = vpop.f32.mrf.mxu0
        %v487 = vadd.f32 %v427, %v486
        %v488 = vpop.f32.mrf.mxu0
        %v489 = vadd.f32 %v427, %v488
        %490 = vmatmul.bf16.gmra.mxu0 %v403
        %v491 = vpop.f32.mrf.mxu0
        %v492 = vadd.f32 %v427, %v491
        %v493 = vpop.f32.mrf.mxu0
        %v494 = vadd.f32 %v427, %v493
        %495 = vmatmul.bf16.gmra.mxu0 %v404
        %v496 = vpop.f32.mrf.mxu0
        %v497 = vadd.f32 %v427, %v496
        %v498 = vpop.f32.mrf.mxu0
        %v499 = vadd.f32 %v427, %v498
        %500 = vmatmul.bf16.gmra.mxu0 %v405
        %v501 = vpop.f32.mrf.mxu0
        %v502 = vadd.f32 %v427, %v501
        %v503 = vpop.f32.mrf.mxu0
        %v504 = vadd.f32 %v427, %v503
        %505 = vmatmul.bf16.gmra.mxu0 %v406
        %v506 = vpop.f32.mrf.mxu0
        %v507 = vadd.f32 %v427, %v506
        %v508 = vpop.f32.mrf.mxu0
        %v509 = vadd.f32 %v427, %v508
        %510 = vmatmul.bf16.gmra.mxu0 %v407
        %v511 = vpop.f32.mrf.mxu0
        %v512 = vadd.f32 %v427, %v511
        %v513 = vpop.f32.mrf.mxu0
        %v514 = vadd.f32 %v427, %v513
        %515 = vmatmul.bf16.gmra.mxu0 %v408
        %v516 = vpop.f32.mrf.mxu0
        %v517 = vadd.f32 %v427, %v516
        %v518 = vpop.f32.mrf.mxu0
        %v519 = vadd.f32 %v427, %v518
        %520 = vdwg.mxu0
        %v521 = vmax.f32 %v487, 0.0
        %v522 = vmax.f32 %v489, 0.0
        %v523 = vmax.f32 %v492, 0.0
        %v524 = vmax.f32 %v494, 0.0
        %v525 = vmax.f32 %v497, 0.0
        %v526 = vmax.f32 %v499, 0.0
        %v527 = vmax.f32 %v502, 0.0
        %v528 = vmax.f32 %v504, 0.0
        %v529 = vmax.f32 %v507, 0.0
        %v530 = vmax.f32 %v509, 0.0
        %v531 = vmax.f32 %v512, 0.0
        %v532 = vmax.f32 %v514, 0.0
        %v533 = vmax.f32 %v517, 0.0
        %v534 = vmax.f32 %v519, 0.0
        %v535 = vpack.c.bf16 %v522, %v521
        %v536 = vpack.c.bf16 %v524, %v523
        %v537 = vpack.c.bf16 %v526, %v525
        %v538 = vpack.c.bf16 %v528, %v527
        %v539 = vpack.c.bf16 %v530, %v529
        %v540 = vpack.c.bf16 %v532, %v531
        %v541 = vpack.c.bf16 %v534, %v533
        %v542 = vld [vmem:[%s5] sm:$0xf]
        %v543 = vld [vmem:[%s5 + $0x4] sm:$0xf]
        %v544 = vld [vmem:[%s5 + $0x8] sm:$0xf]
        %v545 = vld [vmem:[%s5 + $0xc] sm:$0xf]
        %v546 = vld [vmem:[%s5 + $0x10] sm:$0xf]
        %v547 = vld [vmem:[%s5 + $0x14] sm:$0xf]
        %v548 = vld [vmem:[%s5 + $0x18] sm:$0xf]
        %v549 = vld [vmem:[%s5 + $0x1c] sm:$0xf]
        %v550 = vld [vmem:[%s5 + $0x20] sm:$0xf]
        %v551 = vld [vmem:[%s5 + $0x24] sm:$0xf]
        %v552 = vld [vmem:[%s5 + $0x28] sm:$0xf]
        %v553 = vld [vmem:[%s5 + $0x2c] sm:$0xf]
        %v554 = vld [vmem:[%s5 + $0x30] sm:$0xf]
        %v555 = vld [vmem:[%s5 + $0x34] sm:$0xf]
        %v556 = vld [vmem:[%s5 + $0x38] sm:$0xf]
        %v557 = vld [vmem:[%s5 + $0x3c] sm:$0xf]
        %v558 = vld [vmem:[%s6] sm:$0x1]
        %v560 = vperm.slane %v558, 0
        %v578 = vunpack.c.l.b16 %v542
        %v579 = vunpack.c.l.b16 %v543
        %v580 = vunpack.c.l.b16 %v544
        %v581 = vunpack.c.l.b16 %v545
        %v582 = vunpack.c.l.b16 %v546
        %v583 = vunpack.c.l.b16 %v547
        %v584 = vunpack.c.l.b16 %v548
        %v585 = vunpack.c.l.b16 %v549
        %v586 = vunpack.c.l.b16 %v550
        %v587 = vunpack.c.l.b16 %v551
        %v588 = vunpack.c.l.b16 %v552
        %v589 = vunpack.c.l.b16 %v553
        %v590 = vunpack.c.l.b16 %v554
        %v591 = vunpack.c.l.b16 %v555
        %v592 = vunpack.c.l.b16 %v556
        %v593 = vunpack.c.l.b16 %v557
        %v594 = vpack.c.b16 %v579, %v578
        %v595 = vpack.c.b16 %v581, %v580
        %v596 = vpack.c.b16 %v583, %v582
        %v597 = vpack.c.b16 %v585, %v584
        %v598 = vpack.c.b16 %v587, %v586
        %v599 = vpack.c.b16 %v589, %v588
        %v600 = vpack.c.b16 %v591, %v590
        %v601 = vpack.c.b16 %v593, %v592
        %610 = vmatpush.bf16.msra.mxu0 %v601
        %611 = vmatpush.bf16.msra.mxu0 %v600
        %612 = vmatpush.bf16.msra.mxu0 %v599
        %613 = vmatpush.bf16.msra.mxu0 %v598
        %614 = vmatpush.bf16.msra.mxu0 %v597
        %615 = vmatpush.bf16.msra.mxu0 %v596
        %616 = vmatpush.bf16.msra.mxu0 %v595
        %617 = vmatpush.bf16.msra.mxu0 %v594
        %618 = vmatmul.bf16.gmra.mxu0 %v535
        %v619 = vpop.f32.mrf.mxu0
        %v620 = vadd.f32 %v560, %v619
        %v621 = vpop.f32.mrf.mxu0
        %v622 = vadd.f32 %v560, %v621
        %623 = vmatmul.bf16.gmra.mxu0 %v536
        %v624 = vpop.f32.mrf.mxu0
        %v625 = vadd.f32 %v560, %v624
        %v626 = vpop.f32.mrf.mxu0
        %v627 = vadd.f32 %v560, %v626
        %628 = vmatmul.bf16.gmra.mxu0 %v537
        %v629 = vpop.f32.mrf.mxu0
        %v630 = vadd.f32 %v560, %v629
        %v631 = vpop.f32.mrf.mxu0
        %v632 = vadd.f32 %v560, %v631
        %633 = vmatmul.bf16.gmra.mxu0 %v538
        %v634 = vpop.f32.mrf.mxu0
        %v635 = vadd.f32 %v560, %v634
        %v636 = vpop.f32.mrf.mxu0
        %v637 = vadd.f32 %v560, %v636
        %638 = vmatmul.bf16.gmra.mxu0 %v539
        %v639 = vpop.f32.mrf.mxu0
        %v640 = vadd.f32 %v560, %v639
        %v641 = vpop.f32.mrf.mxu0
        %v642 = vadd.f32 %v560, %v641
        %643 = vmatmul.bf16.gmra.mxu0 %v540
        %v644 = vpop.f32.mrf.mxu0
        %v645 = vadd.f32 %v560, %v644
        %v646 = vpop.f32.mrf.mxu0
        %v647 = vadd.f32 %v560, %v646
        %648 = vmatmul.bf16.gmra.mxu0 %v541
        %v649 = vpop.f32.mrf.mxu0
        %v650 = vadd.f32 %v560, %v649
        %v651 = vpop.f32.mrf.mxu0
        %v652 = vadd.f32 %v560, %v651
        %653 = vdwg.mxu0
        %654 = vst [vmem:[%s272] sm:$0xff] %v620
        %655 = vst [vmem:[%s272 + $0x8] sm:$0xff] %v622
        %656 = vst [vmem:[%s272 + $0x10] sm:$0xff] %v625
        %657 = vst [vmem:[%s272 + $0x18] sm:$0xff] %v627
        %658 = vst [vmem:[%s272 + $0x20] sm:$0xff] %v630
        %659 = vst [vmem:[%s272 + $0x28] sm:$0xff] %v632
        %660 = vst [vmem:[%s272 + $0x30] sm:$0xff] %v635
        %661 = vst [vmem:[%s272 + $0x38] sm:$0xff] %v637
        %662 = vst [vmem:[%s272 + $0x40] sm:$0xff] %v640
        %663 = vst [vmem:[%s272 + $0x48] sm:$0xff] %v642
        %664 = vst [vmem:[%s272 + $0x50] sm:$0xff] %v645
        %665 = vst [vmem:[%s272 + $0x58] sm:$0xff] %v647
        %666 = vst [vmem:[%s272 + $0x60] sm:$0xff] %v650
        %667 = vst [vmem:[%s272 + $0x68] sm:$0xff] %v652
        %v668 = vlaneseq
        %v669 = vand.u32 %v668, 127
        %vm670 = vcmp.eq.s32.totalorder %v669, 0
        %v671 = vxor.u32 %v620, 2147483648
        %v672 = vxor.u32 %v622, 2147483648
        %v673 = vxor.u32 %v625, 2147483648
        %v674 = vxor.u32 %v627, 2147483648
        %v675 = vxor.u32 %v630, 2147483648
        %v676 = vxor.u32 %v632, 2147483648
        %v677 = vxor.u32 %v635, 2147483648
        %v678 = vxor.u32 %v637, 2147483648
        %v679 = vxor.u32 %v640, 2147483648
        %v680 = vxor.u32 %v642, 2147483648
        %v681 = vxor.u32 %v645, 2147483648
        %v682 = vxor.u32 %v647, 2147483648
        %v683 = vxor.u32 %v650, 2147483648
        %v684 = vxor.u32 %v652, 2147483648
        %v685 = vmul.f32 %v671, 1.442695
        %v686 = vpow.pop %v685
        %v687 = vmul.f32 %v672, 1.442695
        %v688 = vpow.pop %v687
        %v689 = vmul.f32 %v673, 1.442695
        %v690 = vpow.pop %v689
        %v691 = vmul.f32 %v674, 1.442695
        %v692 = vpow.pop %v691
        %v693 = vmul.f32 %v675, 1.442695
        %v694 = vpow.pop %v693
        %v695 = vmul.f32 %v676, 1.442695
        %v696 = vpow.pop %v695
        %v697 = vmul.f32 %v677, 1.442695
        %v698 = vpow.pop %v697
        %v699 = vmul.f32 %v678, 1.442695
        %v700 = vpow.pop %v699
        %v701 = vmul.f32 %v679, 1.442695
        %v702 = vpow.pop %v701
        %v703 = vmul.f32 %v680, 1.442695
        %v704 = vpow.pop %v703
        %v705 = vmul.f32 %v681, 1.442695
        %v706 = vpow.pop %v705
        %v707 = vmul.f32 %v682, 1.442695
        %v708 = vpow.pop %v707
        %v709 = vmul.f32 %v683, 1.442695
        %v710 = vpow.pop %v709
        %v711 = vmul.f32 %v684, 1.442695
        %v712 = vpow.pop %v711
        %v713 = vadd.f32 %v686, 1.0
        %v714 = vadd.f32 %v688, 1.0
        %v715 = vadd.f32 %v690, 1.0
        %v716 = vadd.f32 %v692, 1.0
        %v717 = vadd.f32 %v694, 1.0
        %v718 = vadd.f32 %v696, 1.0
        %v719 = vadd.f32 %v698, 1.0
        %v720 = vadd.f32 %v700, 1.0
        %v721 = vadd.f32 %v702, 1.0
        %v722 = vadd.f32 %v704, 1.0
        %v723 = vadd.f32 %v706, 1.0
        %v724 = vadd.f32 %v708, 1.0
        %v725 = vadd.f32 %v710, 1.0
        %v726 = vadd.f32 %v712, 1.0
        %v727 = vrcp.pop %v713
        %v728 = vmul.f32 %v713, %v727
        %v729 = vsub.f32 1.0, %v728
        %v730 = vmul.f32 %v727, %v729
        %v731 = vadd.f32 %v727, %v730
        %vm732 = vweird.f32 %v713
        %vm733 = vweird.f32 %v727
        %vm734 = vmor %vm732, %vm733
        %v735 = vsel %vm734, %v727, %v731
        %v736 = vand.u32 2147483647, %v713
        %vm737 = vcmp.eq.f32.partialorder %v736, 8.507059e+37
        %v738 = vand.u32 %v713, 2147483648
        %v739 = vor.u32 1.1754944e-38, %v738
        %v740 = vsel %vm737, %v739, %v735
        %v741 = vmul.f32 1.0, %v740
        %v742 = vrcp.pop %v714
        %v743 = vmul.f32 %v714, %v742
        %v744 = vsub.f32 1.0, %v743
        %v745 = vmul.f32 %v742, %v744
        %v746 = vadd.f32 %v742, %v745
        %vm747 = vweird.f32 %v714
        %vm748 = vweird.f32 %v742
        %vm749 = vmor %vm747, %vm748
        %v750 = vsel %vm749, %v742, %v746
        %v751 = vand.u32 2147483647, %v714
        %vm752 = vcmp.eq.f32.partialorder %v751, 8.507059e+37
        %v753 = vand.u32 %v714, 2147483648
        %v754 = vor.u32 1.1754944e-38, %v753
        %v755 = vsel %vm752, %v754, %v750
        %v756 = vmul.f32 1.0, %v755
        %v757 = vrcp.pop %v715
        %v758 = vmul.f32 %v715, %v757
        %v759 = vsub.f32 1.0, %v758
        %v760 = vmul.f32 %v757, %v759
        %v761 = vadd.f32 %v757, %v760
        %vm762 = vweird.f32 %v715
        %vm763 = vweird.f32 %v757
        %vm764 = vmor %vm762, %vm763
        %v765 = vsel %vm764, %v757, %v761
        %v766 = vand.u32 2147483647, %v715
        %vm767 = vcmp.eq.f32.partialorder %v766, 8.507059e+37
        %v768 = vand.u32 %v715, 2147483648
        %v769 = vor.u32 1.1754944e-38, %v768
        %v770 = vsel %vm767, %v769, %v765
        %v771 = vmul.f32 1.0, %v770
        %v772 = vrcp.pop %v716
        %v773 = vmul.f32 %v716, %v772
        %v774 = vsub.f32 1.0, %v773
        %v775 = vmul.f32 %v772, %v774
        %v776 = vadd.f32 %v772, %v775
        %vm777 = vweird.f32 %v716
        %vm778 = vweird.f32 %v772
        %vm779 = vmor %vm777, %vm778
        %v780 = vsel %vm779, %v772, %v776
        %v781 = vand.u32 2147483647, %v716
        %vm782 = vcmp.eq.f32.partialorder %v781, 8.507059e+37
        %v783 = vand.u32 %v716, 2147483648
        %v784 = vor.u32 1.1754944e-38, %v783
        %v785 = vsel %vm782, %v784, %v780
        %v786 = vmul.f32 1.0, %v785
        %v787 = vrcp.pop %v717
        %v788 = vmul.f32 %v717, %v787
        %v789 = vsub.f32 1.0, %v788
        %v790 = vmul.f32 %v787, %v789
        %v791 = vadd.f32 %v787, %v790
        %vm792 = vweird.f32 %v717
        %vm793 = vweird.f32 %v787
        %vm794 = vmor %vm792, %vm793
        %v795 = vsel %vm794, %v787, %v791
        %v796 = vand.u32 2147483647, %v717
        %vm797 = vcmp.eq.f32.partialorder %v796, 8.507059e+37
        %v798 = vand.u32 %v717, 2147483648
        %v799 = vor.u32 1.1754944e-38, %v798
        %v800 = vsel %vm797, %v799, %v795
        %v801 = vmul.f32 1.0, %v800
        %v802 = vrcp.pop %v718
        %v803 = vmul.f32 %v718, %v802
        %v804 = vsub.f32 1.0, %v803
        %v805 = vmul.f32 %v802, %v804
        %v806 = vadd.f32 %v802, %v805
        %vm807 = vweird.f32 %v718
        %vm808 = vweird.f32 %v802
        %vm809 = vmor %vm807, %vm808
        %v810 = vsel %vm809, %v802, %v806
        %v811 = vand.u32 2147483647, %v718
        %vm812 = vcmp.eq.f32.partialorder %v811, 8.507059e+37
        %v813 = vand.u32 %v718, 2147483648
        %v814 = vor.u32 1.1754944e-38, %v813
        %v815 = vsel %vm812, %v814, %v810
        %v816 = vmul.f32 1.0, %v815
        %v817 = vrcp.pop %v719
        %v818 = vmul.f32 %v719, %v817
        %v819 = vsub.f32 1.0, %v818
        %v820 = vmul.f32 %v817, %v819
        %v821 = vadd.f32 %v817, %v820
        %vm822 = vweird.f32 %v719
        %vm823 = vweird.f32 %v817
        %vm824 = vmor %vm822, %vm823
        %v825 = vsel %vm824, %v817, %v821
        %v826 = vand.u32 2147483647, %v719
        %vm827 = vcmp.eq.f32.partialorder %v826, 8.507059e+37
        %v828 = vand.u32 %v719, 2147483648
        %v829 = vor.u32 1.1754944e-38, %v828
        %v830 = vsel %vm827, %v829, %v825
        %v831 = vmul.f32 1.0, %v830
        %v832 = vrcp.pop %v720
        %v833 = vmul.f32 %v720, %v832
        %v834 = vsub.f32 1.0, %v833
        %v835 = vmul.f32 %v832, %v834
        %v836 = vadd.f32 %v832, %v835
        %vm837 = vweird.f32 %v720
        %vm838 = vweird.f32 %v832
        %vm839 = vmor %vm837, %vm838
        %v840 = vsel %vm839, %v832, %v836
        %v841 = vand.u32 2147483647, %v720
        %vm842 = vcmp.eq.f32.partialorder %v841, 8.507059e+37
        %v843 = vand.u32 %v720, 2147483648
        %v844 = vor.u32 1.1754944e-38, %v843
        %v845 = vsel %vm842, %v844, %v840
        %v846 = vmul.f32 1.0, %v845
        %v847 = vrcp.pop %v721
        %v848 = vmul.f32 %v721, %v847
        %v849 = vsub.f32 1.0, %v848
        %v850 = vmul.f32 %v847, %v849
        %v851 = vadd.f32 %v847, %v850
        %vm852 = vweird.f32 %v721
        %vm853 = vweird.f32 %v847
        %vm854 = vmor %vm852, %vm853
        %v855 = vsel %vm854, %v847, %v851
        %v856 = vand.u32 2147483647, %v721
        %vm857 = vcmp.eq.f32.partialorder %v856, 8.507059e+37
        %v858 = vand.u32 %v721, 2147483648
        %v859 = vor.u32 1.1754944e-38, %v858
        %v860 = vsel %vm857, %v859, %v855
        %v861 = vmul.f32 1.0, %v860
        %v862 = vrcp.pop %v722
        %v863 = vmul.f32 %v722, %v862
        %v864 = vsub.f32 1.0, %v863
        %v865 = vmul.f32 %v862, %v864
        %v866 = vadd.f32 %v862, %v865
        %vm867 = vweird.f32 %v722
        %vm868 = vweird.f32 %v862
        %vm869 = vmor %vm867, %vm868
        %v870 = vsel %vm869, %v862, %v866
        %v871 = vand.u32 2147483647, %v722
        %vm872 = vcmp.eq.f32.partialorder %v871, 8.507059e+37
        %v873 = vand.u32 %v722, 2147483648
        %v874 = vor.u32 1.1754944e-38, %v873
        %v875 = vsel %vm872, %v874, %v870
        %v876 = vmul.f32 1.0, %v875
        %v877 = vrcp.pop %v723
        %v878 = vmul.f32 %v723, %v877
        %v879 = vsub.f32 1.0, %v878
        %v880 = vmul.f32 %v877, %v879
        %v881 = vadd.f32 %v877, %v880
        %vm882 = vweird.f32 %v723
        %vm883 = vweird.f32 %v877
        %vm884 = vmor %vm882, %vm883
        %v885 = vsel %vm884, %v877, %v881
        %v886 = vand.u32 2147483647, %v723
        %vm887 = vcmp.eq.f32.partialorder %v886, 8.507059e+37
        %v888 = vand.u32 %v723, 2147483648
        %v889 = vor.u32 1.1754944e-38, %v888
        %v890 = vsel %vm887, %v889, %v885
        %v891 = vmul.f32 1.0, %v890
        %v892 = vrcp.pop %v724
        %v893 = vmul.f32 %v724, %v892
        %v894 = vsub.f32 1.0, %v893
        %v895 = vmul.f32 %v892, %v894
        %v896 = vadd.f32 %v892, %v895
        %vm897 = vweird.f32 %v724
        %vm898 = vweird.f32 %v892
        %vm899 = vmor %vm897, %vm898
        %v900 = vsel %vm899, %v892, %v896
        %v901 = vand.u32 2147483647, %v724
        %vm902 = vcmp.eq.f32.partialorder %v901, 8.507059e+37
        %v903 = vand.u32 %v724, 2147483648
        %v904 = vor.u32 1.1754944e-38, %v903
        %v905 = vsel %vm902, %v904, %v900
        %v906 = vmul.f32 1.0, %v905
        %v907 = vrcp.pop %v725
        %v908 = vmul.f32 %v725, %v907
        %v909 = vsub.f32 1.0, %v908
        %v910 = vmul.f32 %v907, %v909
        %v911 = vadd.f32 %v907, %v910
        %vm912 = vweird.f32 %v725
        %vm913 = vweird.f32 %v907
        %vm914 = vmor %vm912, %vm913
        %v915 = vsel %vm914, %v907, %v911
        %v916 = vand.u32 2147483647, %v725
        %vm917 = vcmp.eq.f32.partialorder %v916, 8.507059e+37
        %v918 = vand.u32 %v725, 2147483648
        %v919 = vor.u32 1.1754944e-38, %v918
        %v920 = vsel %vm917, %v919, %v915
        %v921 = vmul.f32 1.0, %v920
        %v922 = vrcp.pop %v726
        %v923 = vmul.f32 %v726, %v922
        %v924 = vsub.f32 1.0, %v923
        %v925 = vmul.f32 %v922, %v924
        %v926 = vadd.f32 %v922, %v925
        %vm927 = vweird.f32 %v726
        %vm928 = vweird.f32 %v922
        %vm929 = vmor %vm927, %vm928
        %v930 = vsel %vm929, %v922, %v926
        %v931 = vand.u32 2147483647, %v726
        %vm932 = vcmp.eq.f32.partialorder %v931, 8.507059e+37
        %v933 = vand.u32 %v726, 2147483648
        %v934 = vor.u32 1.1754944e-38, %v933
        %v935 = vsel %vm932, %v934, %v930
        %v936 = vmul.f32 1.0, %v935
        %v937 = vsel %vm670, %v741, %v620
        %v938 = vsel %vm670, %v756, %v622
        %v939 = vsel %vm670, %v771, %v625
        %v940 = vsel %vm670, %v786, %v627
        %v941 = vsel %vm670, %v801, %v630
        %v942 = vsel %vm670, %v816, %v632
        %v943 = vsel %vm670, %v831, %v635
        %v944 = vsel %vm670, %v846, %v637
        %v945 = vsel %vm670, %v861, %v640
        %v946 = vsel %vm670, %v876, %v642
        %v947 = vsel %vm670, %v891, %v645
        %v948 = vsel %vm670, %v906, %v647
        %v949 = vsel %vm670, %v921, %v650
        %v950 = vsel %vm670, %v936, %v652
        %951 = vst [vmem:[%s272] sm:$0xff] %v937
        %952 = vst [vmem:[%s272 + $0x8] sm:$0xff] %v938
        %953 = vst [vmem:[%s272 + $0x10] sm:$0xff] %v939
        %954 = vst [vmem:[%s272 + $0x18] sm:$0xff] %v940
        %955 = vst [vmem:[%s272 + $0x20] sm:$0xff] %v941
        %956 = vst [vmem:[%s272 + $0x28] sm:$0xff] %v942
        %957 = vst [vmem:[%s272 + $0x30] sm:$0xff] %v943
        %958 = vst [vmem:[%s272 + $0x38] sm:$0xff] %v944
        %959 = vst [vmem:[%s272 + $0x40] sm:$0xff] %v945
        %960 = vst [vmem:[%s272 + $0x48] sm:$0xff] %v946
        %961 = vst [vmem:[%s272 + $0x50] sm:$0xff] %v947
        %962 = vst [vmem:[%s272 + $0x58] sm:$0xff] %v948
        %963 = vst [vmem:[%s272 + $0x60] sm:$0xff] %v949
        %964 = vst [vmem:[%s272 + $0x68] sm:$0xff] %v950
        %s965 = sand.u32 %s181, 1
        %s966 = scalar_lea.sflag [#allocation3], %s965
        %s967 = sand.u32 %s181, 1
        %s968 = smul.addr %s967, 112
        %s969 = scalar_lea.vmem [#allocation2], %s968
        // Predicated region
        $region49: #{tpu_custom_call.1} parent=47 // pred_check
          %p970 = pneg %p191
        $region50: #{tpu_custom_call.1} parent=47 // pred_check_branch
          %972 = sbr.rel (%p970) target = $region52
        $region51: #{tpu_custom_call.1} parent=47 // pred_region
          %s973 = smul.u32 14, %s21
          %975 = vsyncadd %s966, 0
          %s976 = smul.addr %s973, 8
          %s977 = scalar_lea.hbm %s7, %s976
          %s978 = sshll.u32 %s969, 4
          %s979 = int_to_ptr.vmem [resolvable:$true] %s978
          %s980 = sshll.u32 %s977, 4
          %s981 = int_to_ptr.hbm [resolvable:$true] %s980
          %986 = dma.vmem_to_hbm [thread:$0]  %s979, 1792, %s981, %s966, 128, 128, 8
        $region52: #{tpu_custom_call.1} parent=47 // pred_fallthru
          _
      $region48: #{tpu_custom_call.1} parent=5 // pred_fallthru
        _
      %p987 = scmp.le.s32.totalorder 2, %s16
      // Predicated region
      $region53: #{tpu_custom_call.1} parent=5 // pred_check
        %p988 = pneg %p987
      $region54: #{tpu_custom_call.1} parent=5 // pred_check_branch
        %990 = sbr.rel (%p988) target = $region56
      $region55: #{tpu_custom_call.1} parent=5 // pred_region
        %s991 = ssub.s32 %s16, 2
        // Predicated region
        $region57: #{tpu_custom_call.1} parent=55 // pred_check
          %p992 = pneg %p197
        $region58: #{tpu_custom_call.1} parent=55 // pred_check_branch
          %994 = sbr.rel (%p992) target = $region60
        $region59: #{tpu_custom_call.1} parent=55 // pred_region
          %s995 = sand.u32 %s182, 1
          %s996 = scalar_lea.sflag [#allocation3], %s995
          %s997 = sand.u32 %s182, 1
          %s998 = smul.addr %s997, 112
          %s999 = scalar_lea.vmem [#allocation2], %s998
          %1001 = dma.done %s996, 1792
        $region60: #{tpu_custom_call.1} parent=55 // pred_fallthru
          _
      $region56: #{tpu_custom_call.1} parent=5 // pred_fallthru
        _
    $region6: #{tpu_custom_call.1} parent=1 // loop_footer
      %s20 = sadd.s32 1, %s16
    $region7: #{tpu_custom_call.1} parent=1 // loop_footer_branch
      %15 = sbr.rel target = $region3
    $region8: #{tpu_custom_call.1} parent=1 // loop_exit
      _
    %1002 = vsyncpa [#allocation3], 1
    %s1003 = scalar_lea.sflag [#allocation3], 1
    %1004 = vsyncpa %s1003, 1

</llo_original>
